<compile_context>
chip_gen: v6e
topology: v6e:2x2x1
jax: 0.10.0
libtpu: 0.0.40
codegen_flags: <defaults>
</compile_context>

<pallas_src>
import functools

import jax
import jax.numpy as jnp
from jax import lax
from jax.experimental import pallas as pl
from jax.experimental.pallas import tpu as pltpu


# ---------------------------------------------------------------------------
# Fused kernel: conv (1 MXU matmul) + BatchNorm stats + BN + ReLU.
# ---------------------------------------------------------------------------
def unit_fused_kernel(xp_ref, wcat_ref, fold_ref, foldt_ref, gamma_ref,
                      beta_ref, o_ref, *, eps):
    # xp_ref:    (N, H+2, L)        padded, channel-packed input, L = lane-
    #                               padded (W+2)*Cin (multiple of 128)
    # wcat_ref:  (3*L, W*Cout)      banded conv weights, 3 ky chunks stacked in K
    # fold_ref:  (W*Cout, Cout)     0/1 matrix: packed lanes -> per-channel sum
    # foldt_ref: (Cout, W*Cout)     transpose: per-channel -> packed lanes
    # gamma/beta_ref: (1, W*Cout)   BN affine params pre-tiled per lane
    # o_ref:     (N*H, W*Cout)      fused output (lane-dense)
    N, Hp, L = xp_ref.shape
    H = Hp - 2
    NH, WC = o_ref.shape
    Cout = fold_ref.shape[1]
    Wd = WC // Cout
    inv_cnt = 1.0 / float(N * H * Wd)

    x = xp_ref[...]                                       # (N, Hp, L)

    # im2col along H: each output row h needs padded rows {h, h+1, h+2}.
    # Every ky chunk is exactly L (=128) lanes wide -> aligned lane concat.
    parts = []
    for n in range(N):                                    # N is small & static
        xs = x[n]                                         # (Hp, L)
        parts.append(jnp.concatenate(
            [xs[0:H], xs[1:H + 1], xs[2:H + 2]], axis=-1))  # (H, 3*L)
    lhs = jnp.concatenate(parts, axis=0)                  # (NH, 3*L)

    # 3x3 conv for the whole batch as ONE MXU matmul (kx, ky, Cin folded in K).
    acc = jnp.dot(lhs, wcat_ref[...],
                  preferred_element_type=jnp.float32)     # (NH, WC)

    # --- BatchNorm (training mode) statistics, two-pass, fully in-kernel ---
    rowsum = jnp.sum(acc, axis=0, keepdims=True)                      # (1, WC)
    mean_c = jnp.dot(rowsum, fold_ref[...],
                     preferred_element_type=jnp.float32) * inv_cnt    # (1, Cout)
    mean_t = jnp.dot(mean_c, foldt_ref[...],
                     preferred_element_type=jnp.float32)              # (1, WC)

    centered = acc - mean_t                                           # (NH, WC)
    sqsum = jnp.sum(centered * centered, axis=0, keepdims=True)       # (1, WC)
    var_c = jnp.dot(sqsum, fold_ref[...],
                    preferred_element_type=jnp.float32) * inv_cnt     # (1, Cout)
    var_t = jnp.dot(var_c, foldt_ref[...],
                    preferred_element_type=jnp.float32)               # (1, WC)

    # --- BN affine + ReLU, single full-width store ---
    scale_t = gamma_ref[...] * lax.rsqrt(var_t + eps)                 # EUP
    o_ref[...] = jnp.maximum(centered * scale_t + beta_ref[...], 0.0)


# ---------------------------------------------------------------------------
# Wrapper-side weight preprocessing: banded conv-as-matmul matrix.
#   band[ky, j*Cin + c, w*Cout + o] = w[o, c, ky, j - w]   if 0 <= j-w <= 2
# ---------------------------------------------------------------------------
def _banded_conv_weights(w_oihw, Wd):
    Cout, Cin = w_oihw.shape[0], w_oihw.shape[1]
    Wp = Wd + 2
    w_hwio = jnp.transpose(w_oihw, (2, 3, 1, 0)).astype(jnp.float32)  # (3,3,Ci,Co)
    j_idx = jnp.arange(Wp)[:, None]                     # (Wp, 1)
    w_idx = jnp.arange(Wd)[None, :]                     # (1, Wd)
    kx = j_idx - w_idx                                  # (Wp, Wd)
    valid = ((kx >= 0) & (kx <= 2)).astype(jnp.float32)
    taps = w_hwio[:, jnp.clip(kx, 0, 2)]                # (3, Wp, Wd, Cin, Cout)
    taps = taps * valid[None, :, :, None, None]
    return jnp.transpose(taps, (0, 1, 3, 2, 4)).reshape(3, Wp * Cin, Wd * Cout)


# ---------------------------------------------------------------------------
# Forward (NCHW in / NCHW out, matching PyTorch).
# ---------------------------------------------------------------------------
@functools.partial(jax.jit, static_argnames=("eps",))
def unit_forward(x_nchw, w_oihw, bias, gamma, beta, eps=1e-5):
    del bias  # cancels exactly under training-mode BatchNorm (mean subtraction)

    N, Cin, H, Wd = x_nchw.shape
    Cout = w_oihw.shape[0]
    Hp, Wp = H + 2, Wd + 2
    WC = Wd * Cout
    KpC = Wp * Cin
    L = ((KpC + 127) // 128) * 128                      # lane-padded chunk width
    NH = N * H

    # Interface-mandated layout transform (single fused XLA copy): NCHW ->
    # NHWC, zero-pad spatially, pack (W, Cin) into lanes, lane-pad to L.
    x = jnp.transpose(x_nchw, (0, 2, 3, 1)).astype(jnp.float32)
    xp = jnp.pad(x, ((0, 0), (1, 1), (1, 1), (0, 0))).reshape(N, Hp, KpC)
    xp = jnp.pad(xp, ((0, 0), (0, 0), (0, L - KpC)))    # (N, Hp, L)

    band = _banded_conv_weights(w_oihw, Wd)             # (3, KpC, WC)
    band = jnp.pad(band, ((0, 0), (0, L - KpC), (0, 0)))
    wcat = band.reshape(3 * L, WC)                      # (3*L, WC), zero pad rows

    fold = jnp.tile(jnp.eye(Cout, dtype=jnp.float32), (Wd, 1))   # (WC, Cout)
    foldt = fold.T                                                # (Cout, WC)
    gamma_t = jnp.tile(gamma.astype(jnp.float32), Wd).reshape(1, WC)
    beta_t = jnp.tile(beta.astype(jnp.float32), Wd).reshape(1, WC)

    cost = pl.CostEstimate(
        flops=2 * NH * (3 * L) * WC + 6 * NH * WC + 8 * WC * Cout,
        transcendentals=WC,
        bytes_accessed=4 * (xp.size + wcat.size + fold.size + foldt.size
                            + 2 * WC + NH * WC))

    out2 = pl.pallas_call(
        functools.partial(unit_fused_kernel, eps=eps),
        out_shape=jax.ShapeDtypeStruct((NH, WC), jnp.float32),
        grid_spec=pltpu.PrefetchScalarGridSpec(
            num_scalar_prefetch=0,
            grid=(1,),                                  # fully VMEM-resident
            in_specs=[
                pl.BlockSpec((N, Hp, L), lambda i: (0, 0, 0)),
                pl.BlockSpec((3 * L, WC), lambda i: (0, 0)),
                pl.BlockSpec((WC, Cout), lambda i: (0, 0)),
                pl.BlockSpec((Cout, WC), lambda i: (0, 0)),
                pl.BlockSpec((1, WC), lambda i: (0, 0)),
                pl.BlockSpec((1, WC), lambda i: (0, 0)),
            ],
            out_specs=pl.BlockSpec((NH, WC), lambda i: (0, 0)),
        ),
        compiler_params=pltpu.CompilerParams(
            dimension_semantics=("arbitrary",),
            vmem_limit_bytes=32 * 1024 * 1024),
        cost_estimate=cost,
    )(xp, wcat, fold, foldt, gamma_t, beta_t)

    # Interface-mandated output transform back to PyTorch's NCHW.
    return jnp.transpose(out2.reshape(N, H, Wd, Cout), (0, 3, 1, 2))


# ---------------------------------------------------------------------------
# Pure-JAX reference (keeps the conv bias; checks the bias-cancellation too).
# ---------------------------------------------------------------------------
def unit_reference(x_nchw, w_oihw, bias, gamma, beta, eps=1e-5):
    y = lax.conv_general_dilated(
        x_nchw, w_oihw, window_strides=(1, 1), padding=((1, 1), (1, 1)),
        dimension_numbers=("NCHW", "OIHW", "NCHW"))
    y = y + bias.reshape(1, -1, 1, 1)
    mean = jnp.mean(y, axis=(0, 2, 3), keepdims=True)
    var = jnp.mean((y - mean) ** 2, axis=(0, 2, 3), keepdims=True)
    yn = (y - mean) / jnp.sqrt(var + eps)
    yn = yn * gamma.reshape(1, -1, 1, 1) + beta.reshape(1, -1, 1, 1)
    return jnp.maximum(yn, 0.0)


if __name__ == "__main__":
    key = jax.random.PRNGKey(0)
    k_x, k_w, k_b = jax.random.split(key, 3)

    N, Cin, H, W = 2, 4, 16, 16
    Cout = 8

    x = jax.random.normal(k_x, (N, Cin, H, W), dtype=jnp.float32)
    fan_in = Cin * 3 * 3
    w = jax.random.uniform(k_w, (Cout, Cin, 3, 3), dtype=jnp.float32,
                           minval=-1.0, maxval=1.0) / jnp.sqrt(fan_in)
    b = jax.random.uniform(k_b, (Cout,), dtype=jnp.float32,
                           minval=-1.0, maxval=1.0) / jnp.sqrt(fan_in)
    gamma = jnp.ones((Cout,), jnp.float32)   # BatchNorm2d default init
    beta = jnp.zeros((Cout,), jnp.float32)

    out = unit_forward(x, w, b, gamma, beta)
    out = jax.block_until_ready(out)

    ref = unit_reference(x, w, b, gamma, beta)
    assert out.shape == (N, Cout, H, W)
    assert jnp.allclose(out, ref, rtol=1e-4, atol=1e-4), "mismatch vs reference"

    print("KERNEL_OK")
</pallas_src>

<mosaic_0001>
module attributes {stable_mosaic.version = 11 : i64} {
  func.func @unit_fused_kernel(%arg0: i32, %arg1: memref<2x18x128xf32, #tpu.memory_space<vmem>>, %arg2: memref<384x128xf32, #tpu.memory_space<vmem>>, %arg3: memref<128x8xf32, #tpu.memory_space<vmem>>, %arg4: memref<8x128xf32, #tpu.memory_space<vmem>>, %arg5: memref<1x128xf32, #tpu.memory_space<vmem>>, %arg6: memref<1x128xf32, #tpu.memory_space<vmem>>, %arg7: memref<32x128xf32, #tpu.memory_space<vmem>>) attributes {dimension_semantics = [#tpu.dimension_semantics<arbitrary>], iteration_bounds = array<i64: 1>, scalar_prefetch = 0 : i64, scratch_operands = 0 : i64, tpu.core_type = #tpu.core_type<tc>, window_params = [{pipeline_mode = #tpu.pipeline_mode<synchronous>, transform_indices = @transform_0, window_bounds = array<i64: 2, 18, 128>}, {pipeline_mode = #tpu.pipeline_mode<synchronous>, transform_indices = @transform_1, window_bounds = array<i64: 384, 128>}, {pipeline_mode = #tpu.pipeline_mode<synchronous>, transform_indices = @transform_2, window_bounds = array<i64: 128, 8>}, {pipeline_mode = #tpu.pipeline_mode<synchronous>, transform_indices = @transform_3, window_bounds = array<i64: 8, 128>}, {pipeline_mode = #tpu.pipeline_mode<synchronous>, transform_indices = @transform_4, window_bounds = array<i64: 1, 128>}, {pipeline_mode = #tpu.pipeline_mode<synchronous>, transform_indices = @transform_5, window_bounds = array<i64: 1, 128>}, {pipeline_mode = #tpu.pipeline_mode<synchronous>, transform_indices = @transform_6, window_bounds = array<i64: 32, 128>}]} {
    %c0 = arith.constant 0 : index
    %c0_0 = arith.constant 0 : index
    %c0_1 = arith.constant 0 : index
    %0 = vector.load %arg1[%c0, %c0_0, %c0_1] : memref<2x18x128xf32, #tpu.memory_space<vmem>>, vector<2x18x128xf32>
    %1 = vector.extract_strided_slice %0 {offsets = [0, 0, 0], sizes = [1, 18, 128], strides = [1, 1, 1]} : vector<2x18x128xf32> to vector<1x18x128xf32>
    %2 = vector.shape_cast %1 : vector<1x18x128xf32> to vector<18x128xf32>
    %3 = vector.extract_strided_slice %2 {offsets = [0, 0], sizes = [16, 128], strides = [1, 1]} : vector<18x128xf32> to vector<16x128xf32>
    %4 = vector.extract_strided_slice %2 {offsets = [1, 0], sizes = [16, 128], strides = [1, 1]} : vector<18x128xf32> to vector<16x128xf32>
    %5 = vector.extract_strided_slice %2 {offsets = [2, 0], sizes = [16, 128], strides = [1, 1]} : vector<18x128xf32> to vector<16x128xf32>
    %6 = tpu.concatenate %3, %4, %5 in 1 : vector<16x128xf32>, vector<16x128xf32>, vector<16x128xf32> -> vector<16x384xf32>
    %7 = vector.extract_strided_slice %0 {offsets = [1, 0, 0], sizes = [1, 18, 128], strides = [1, 1, 1]} : vector<2x18x128xf32> to vector<1x18x128xf32>
    %8 = vector.shape_cast %7 : vector<1x18x128xf32> to vector<18x128xf32>
    %9 = vector.extract_strided_slice %8 {offsets = [0, 0], sizes = [16, 128], strides = [1, 1]} : vector<18x128xf32> to vector<16x128xf32>
    %10 = vector.extract_strided_slice %8 {offsets = [1, 0], sizes = [16, 128], strides = [1, 1]} : vector<18x128xf32> to vector<16x128xf32>
    %11 = vector.extract_strided_slice %8 {offsets = [2, 0], sizes = [16, 128], strides = [1, 1]} : vector<18x128xf32> to vector<16x128xf32>
    %12 = tpu.concatenate %9, %10, %11 in 1 : vector<16x128xf32>, vector<16x128xf32>, vector<16x128xf32> -> vector<16x384xf32>
    %13 = tpu.concatenate %6, %12 in 0 : vector<16x384xf32>, vector<16x384xf32> -> vector<32x384xf32>
    %c0_2 = arith.constant 0 : index
    %c0_3 = arith.constant 0 : index
    %14 = vector.load %arg2[%c0_2, %c0_3] : memref<384x128xf32, #tpu.memory_space<vmem>>, vector<384x128xf32>
    %cst = arith.constant dense<0.000000e+00> : vector<32x128xf32>
    %15 = tpu.matmul %13, %14, %cst {dimension_numbers = #tpu.dot_dimension_numbers<[1], [0], [0], [1], [0, 0, 1, 1], [], []>} : vector<32x384xf32>, vector<384x128xf32>, vector<32x128xf32> -> vector<32x128xf32>
    %cst_4 = arith.constant dense<0.000000e+00> : vector<128xf32>
    %16 = vector.multi_reduction <add>, %15, %cst_4 [0] : vector<32x128xf32> to vector<128xf32>
    %17 = vector.shape_cast %16 : vector<128xf32> to vector<1x128xf32>
    %c0_5 = arith.constant 0 : index
    %c0_6 = arith.constant 0 : index
    %18 = vector.load %arg3[%c0_5, %c0_6] : memref<128x8xf32, #tpu.memory_space<vmem>>, vector<128x8xf32>
    %cst_7 = arith.constant dense<0.000000e+00> : vector<1x8xf32>
    %19 = tpu.matmul %17, %18, %cst_7 {dimension_numbers = #tpu.dot_dimension_numbers<[1], [0], [0], [1], [0, 0, 1, 1], [], []>} : vector<1x128xf32>, vector<128x8xf32>, vector<1x8xf32> -> vector<1x8xf32>
    %cst_8 = arith.constant 0.001953125 : f32
    %20 = vector.broadcast %cst_8 : f32 to vector<1x8xf32>
    %21 = arith.mulf %19, %20 : vector<1x8xf32>
    %c0_9 = arith.constant 0 : index
    %c0_10 = arith.constant 0 : index
    %22 = vector.load %arg4[%c0_9, %c0_10] : memref<8x128xf32, #tpu.memory_space<vmem>>, vector<8x128xf32>
    %cst_11 = arith.constant dense<0.000000e+00> : vector<1x128xf32>
    %23 = tpu.matmul %21, %22, %cst_11 {dimension_numbers = #tpu.dot_dimension_numbers<[1], [0], [0], [1], [0, 0, 1, 1], [], []>} : vector<1x8xf32>, vector<8x128xf32>, vector<1x128xf32> -> vector<1x128xf32>
    %24 = vector.broadcast %23 : vector<1x128xf32> to vector<32x128xf32>
    %25 = arith.subf %15, %24 : vector<32x128xf32>
    %26 = arith.mulf %25, %25 : vector<32x128xf32>
    %cst_12 = arith.constant dense<0.000000e+00> : vector<128xf32>
    %27 = vector.multi_reduction <add>, %26, %cst_12 [0] : vector<32x128xf32> to vector<128xf32>
    %28 = vector.shape_cast %27 : vector<128xf32> to vector<1x128xf32>
    %c0_13 = arith.constant 0 : index
    %c0_14 = arith.constant 0 : index
    %29 = vector.load %arg3[%c0_13, %c0_14] : memref<128x8xf32, #tpu.memory_space<vmem>>, vector<128x8xf32>
    %cst_15 = arith.constant dense<0.000000e+00> : vector<1x8xf32>
    %30 = tpu.matmul %28, %29, %cst_15 {dimension_numbers = #tpu.dot_dimension_numbers<[1], [0], [0], [1], [0, 0, 1, 1], [], []>} : vector<1x128xf32>, vector<128x8xf32>, vector<1x8xf32> -> vector<1x8xf32>
    %cst_16 = arith.constant 0.001953125 : f32
    %31 = vector.broadcast %cst_16 : f32 to vector<1x8xf32>
    %32 = arith.mulf %30, %31 : vector<1x8xf32>
    %c0_17 = arith.constant 0 : index
    %c0_18 = arith.constant 0 : index
    %33 = vector.load %arg4[%c0_17, %c0_18] : memref<8x128xf32, #tpu.memory_space<vmem>>, vector<8x128xf32>
    %cst_19 = arith.constant dense<0.000000e+00> : vector<1x128xf32>
    %34 = tpu.matmul %32, %33, %cst_19 {dimension_numbers = #tpu.dot_dimension_numbers<[1], [0], [0], [1], [0, 0, 1, 1], [], []>} : vector<1x8xf32>, vector<8x128xf32>, vector<1x128xf32> -> vector<1x128xf32>
    %c0_20 = arith.constant 0 : index
    %c0_21 = arith.constant 0 : index
    %35 = vector.load %arg5[%c0_20, %c0_21] : memref<1x128xf32, #tpu.memory_space<vmem>>, vector<1x128xf32>
    %cst_22 = arith.constant 9.99999974E-6 : f32
    %36 = vector.broadcast %cst_22 : f32 to vector<1x128xf32>
    %37 = arith.addf %34, %36 : vector<1x128xf32>
    %38 = math.rsqrt %37 : vector<1x128xf32>
    %39 = arith.mulf %35, %38 : vector<1x128xf32>
    %40 = vector.broadcast %39 : vector<1x128xf32> to vector<32x128xf32>
    %41 = arith.mulf %25, %40 : vector<32x128xf32>
    %c0_23 = arith.constant 0 : index
    %c0_24 = arith.constant 0 : index
    %42 = vector.load %arg6[%c0_23, %c0_24] : memref<1x128xf32, #tpu.memory_space<vmem>>, vector<1x128xf32>
    %43 = vector.broadcast %42 : vector<1x128xf32> to vector<32x128xf32>
    %44 = arith.addf %41, %43 : vector<32x128xf32>
    %cst_25 = arith.constant 0.000000e+00 : f32
    %45 = vector.broadcast %cst_25 : f32 to vector<32x128xf32>
    %46 = arith.maximumf %44, %45 : vector<32x128xf32>
    %c0_26 = arith.constant 0 : index
    %c0_27 = arith.constant 0 : index
    %47 = vector.load %arg7[%c0_26, %c0_27] : memref<32x128xf32, #tpu.memory_space<vmem>>, vector<32x128xf32>
    tpu.vector_store %arg7[%c0_26, %c0_27], %46 {strides = array<i32>} : memref<32x128xf32, #tpu.memory_space<vmem>>, vector<32x128xf32>,
    return
  }
  func.func @transform_0(%arg0: i32) -> (i32, i32, i32) {
    %c0_i32 = arith.constant 0 : i32
    %c0_i32_0 = arith.constant 0 : i32
    %c0_i32_1 = arith.constant 0 : i32
    %c0_i32_2 = arith.constant 0 : i32
    return %c0_i32, %c0_i32_0, %c0_i32_1 : i32, i32, i32
  }
  func.func @transform_1(%arg0: i32) -> (i32, i32) {
    %c0_i32 = arith.constant 0 : i32
    %c0_i32_0 = arith.constant 0 : i32
    %c0_i32_1 = arith.constant 0 : i32
    return %c0_i32, %c0_i32_0 : i32, i32
  }
  func.func @transform_2(%arg0: i32) -> (i32, i32) {
    %c0_i32 = arith.constant 0 : i32
    %c0_i32_0 = arith.constant 0 : i32
    %c0_i32_1 = arith.constant 0 : i32
    return %c0_i32, %c0_i32_0 : i32, i32
  }
  func.func @transform_3(%arg0: i32) -> (i32, i32) {
    %c0_i32 = arith.constant 0 : i32
    %c0_i32_0 = arith.constant 0 : i32
    %c0_i32_1 = arith.constant 0 : i32
    return %c0_i32, %c0_i32_0 : i32, i32
  }
  func.func @transform_4(%arg0: i32) -> (i32, i32) {
    %c0_i32 = arith.constant 0 : i32
    %c0_i32_0 = arith.constant 0 : i32
    %c0_i32_1 = arith.constant 0 : i32
    return %c0_i32, %c0_i32_0 : i32, i32
  }
  func.func @transform_5(%arg0: i32) -> (i32, i32) {
    %c0_i32 = arith.constant 0 : i32
    %c0_i32_0 = arith.constant 0 : i32
    %c0_i32_1 = arith.constant 0 : i32
    return %c0_i32, %c0_i32_0 : i32, i32
  }
  func.func @transform_6(%arg0: i32) -> (i32, i32) {
    %c0_i32 = arith.constant 0 : i32
    %c0_i32_0 = arith.constant 0 : i32
    %c0_i32_1 = arith.constant 0 : i32
    return %c0_i32, %c0_i32_0 : i32, i32
  }
}

</mosaic_0001>

<llo_original>
// kernel: tile.19
$region0: #{tile.19}
  %s0 = inlined_call_operand.vmem [shape: f32[16,8,8], index: 0, kind: input, shape index: {}]
  %s1 = inlined_call_operand.vmem [shape: f32[128,8], index: 1, kind: output, shape index: {}]
  %s2 = smov 3
  %v3 = vld [vmem:[%s0] ss:$16 sm:%s2]
  %s4 = smov 12
  %v5 = vld [vmem:[%s0] ss:$16 sm:%s4]
  %vm6 = vcmask 1043458
  %v7 = vsel %vm6, %v5, %v3
  %s8 = smov 48
  %v9 = vld [vmem:[%s0] ss:$16 sm:%s8]
  %vm10 = vcmask 1045508
  %v11 = vsel %vm10, %v9, %v7
  %s12 = smov 192
  %v13 = vld [vmem:[%s0] ss:$16 sm:%s12]
  %vm14 = vcmask 1047558
  %v15 = vsel %vm14, %v13, %v11
  %vm16 = vcmask 64512
  %17 = vst.msk [vmem:[%s1] sm:$0xff] %vm16, %v15
  %s18 = scalar_lea.vmem %s0, 15
  %s19 = smov 3
  %v20 = vld [vmem:[%s18] ss:$16 sm:%s19]
  %s21 = scalar_lea.vmem %s0, 15
  %s22 = smov 12
  %v23 = vld [vmem:[%s21] ss:$16 sm:%s22]
  %vm24 = vcmask 1043458
  %v25 = vsel %vm24, %v23, %v20
  %s26 = scalar_lea.vmem %s0, 15
  %s27 = smov 48
  %v28 = vld [vmem:[%s26] ss:$16 sm:%s27]
  %vm29 = vcmask 1045508
  %v30 = vsel %vm29, %v28, %v25
  %s31 = scalar_lea.vmem %s0, 15
  %s32 = smov 192
  %v33 = vld [vmem:[%s31] ss:$16 sm:%s32]
  %vm34 = vcmask 1047558
  %v35 = vsel %vm34, %v33, %v30
  %36 = vrot.lane.b32.xlu0 %v35, 120
  %v37 = vpop.permute.xlu0 %36
  %vm38 = vcmask 1048512
  %39 = vst.msk [vmem:[%s1] sm:$0xff] %vm38, %v37
  %s40 = scalar_lea.vmem %s0, 14
  %s41 = smov 3
  %v42 = vld [vmem:[%s40] ss:$16 sm:%s41]
  %s43 = scalar_lea.vmem %s0, 14
  %s44 = smov 12
  %v45 = vld [vmem:[%s43] ss:$16 sm:%s44]
  %vm46 = vcmask 1043458
  %v47 = vsel %vm46, %v45, %v42
  %s48 = scalar_lea.vmem %s0, 14
  %s49 = smov 48
  %v50 = vld [vmem:[%s48] ss:$16 sm:%s49]
  %vm51 = vcmask 1045508
  %v52 = vsel %vm51, %v50, %v47
  %s53 = scalar_lea.vmem %s0, 14
  %s54 = smov 192
  %v55 = vld [vmem:[%s53] ss:$16 sm:%s54]
  %vm56 = vcmask 1047558
  %v57 = vsel %vm56, %v55, %v52
  %58 = vrot.lane.b32.xlu0 %v57, 112
  %v59 = vpop.permute.xlu0 %58
  %vm60 = vcmask 982912
  %61 = vst.msk [vmem:[%s1] sm:$0xff] %vm60, %v59
  %s62 = scalar_lea.vmem %s0, 13
  %s63 = smov 3
  %v64 = vld [vmem:[%s62] ss:$16 sm:%s63]
  %s65 = scalar_lea.vmem %s0, 13
  %s66 = smov 12
  %v67 = vld [vmem:[%s65] ss:$16 sm:%s66]
  %vm68 = vcmask 1043458
  %v69 = vsel %vm68, %v67, %v64
  %s70 = scalar_lea.vmem %s0, 13
  %s71 = smov 48
  %v72 = vld [vmem:[%s70] ss:$16 sm:%s71]
  %vm73 = vcmask 1045508
  %v74 = vsel %vm73, %v72, %v69
  %s75 = scalar_lea.vmem %s0, 13
  %s76 = smov 192
  %v77 = vld [vmem:[%s75] ss:$16 sm:%s76]
  %vm78 = vcmask 1047558
  %v79 = vsel %vm78, %v77, %v74
  %80 = vrot.lane.b32.xlu0 %v79, 104
  %v81 = vpop.permute.xlu0 %80
  %vm82 = vcmask 917312
  %83 = vst.msk [vmem:[%s1] sm:$0xff] %vm82, %v81
  %s84 = scalar_lea.vmem %s0, 12
  %s85 = smov 3
  %v86 = vld [vmem:[%s84] ss:$16 sm:%s85]
  %s87 = scalar_lea.vmem %s0, 12
  %s88 = smov 12
  %v89 = vld [vmem:[%s87] ss:$16 sm:%s88]
  %vm90 = vcmask 1043458
  %v91 = vsel %vm90, %v89, %v86
  %s92 = scalar_lea.vmem %s0, 12
  %s93 = smov 48
  %v94 = vld [vmem:[%s92] ss:$16 sm:%s93]
  %vm95 = vcmask 1045508
  %v96 = vsel %vm95, %v94, %v91
  %s97 = scalar_lea.vmem %s0, 12
  %s98 = smov 192
  %v99 = vld [vmem:[%s97] ss:$16 sm:%s98]
  %vm100 = vcmask 1047558
  %v101 = vsel %vm100, %v99, %v96
  %102 = vrot.lane.b32.xlu0 %v101, 96
  %v103 = vpop.permute.xlu0 %102
  %vm104 = vcmask 851712
  %105 = vst.msk [vmem:[%s1] sm:$0xff] %vm104, %v103
  %s106 = scalar_lea.vmem %s0, 11
  %s107 = smov 3
  %v108 = vld [vmem:[%s106] ss:$16 sm:%s107]
  %s109 = scalar_lea.vmem %s0, 11
  %s110 = smov 12
  %v111 = vld [vmem:[%s109] ss:$16 sm:%s110]
  %vm112 = vcmask 1043458
  %v113 = vsel %vm112, %v111, %v108
  %s114 = scalar_lea.vmem %s0, 11
  %s115 = smov 48
  %v116 = vld [vmem:[%s114] ss:$16 sm:%s115]
  %vm117 = vcmask 1045508
  %v118 = vsel %vm117, %v116, %v113
  %s119 = scalar_lea.vmem %s0, 11
  %s120 = smov 192
  %v121 = vld [vmem:[%s119] ss:$16 sm:%s120]
  %vm122 = vcmask 1047558
  %v123 = vsel %vm122, %v121, %v118
  %124 = vrot.lane.b32.xlu0 %v123, 88
  %v125 = vpop.permute.xlu0 %124
  %vm126 = vcmask 786112
  %127 = vst.msk [vmem:[%s1] sm:$0xff] %vm126, %v125
  %s128 = scalar_lea.vmem %s0, 10
  %s129 = smov 3
  %v130 = vld [vmem:[%s128] ss:$16 sm:%s129]
  %s131 = scalar_lea.vmem %s0, 10
  %s132 = smov 12
  %v133 = vld [vmem:[%s131] ss:$16 sm:%s132]
  %vm134 = vcmask 1043458
  %v135 = vsel %vm134, %v133, %v130
  %s136 = scalar_lea.vmem %s0, 10
  %s137 = smov 48
  %v138 = vld [vmem:[%s136] ss:$16 sm:%s137]
  %vm139 = vcmask 1045508
  %v140 = vsel %vm139, %v138, %v135
  %s141 = scalar_lea.vmem %s0, 10
  %s142 = smov 192
  %v143 = vld [vmem:[%s141] ss:$16 sm:%s142]
  %vm144 = vcmask 1047558
  %v145 = vsel %vm144, %v143, %v140
  %146 = vrot.lane.b32.xlu0 %v145, 80
  %v147 = vpop.permute.xlu0 %146
  %vm148 = vcmask 720512
  %149 = vst.msk [vmem:[%s1] sm:$0xff] %vm148, %v147
  %s150 = scalar_lea.vmem %s0, 9
  %s151 = smov 3
  %v152 = vld [vmem:[%s150] ss:$16 sm:%s151]
  %s153 = scalar_lea.vmem %s0, 9
  %s154 = smov 12
  %v155 = vld [vmem:[%s153] ss:$16 sm:%s154]
  %vm156 = vcmask 1043458
  %v157 = vsel %vm156, %v155, %v152
  %s158 = scalar_lea.vmem %s0, 9
  %s159 = smov 48
  %v160 = vld [vmem:[%s158] ss:$16 sm:%s159]
  %vm161 = vcmask 1045508
  %v162 = vsel %vm161, %v160, %v157
  %s163 = scalar_lea.vmem %s0, 9
  %s164 = smov 192
  %v165 = vld [vmem:[%s163] ss:$16 sm:%s164]
  %vm166 = vcmask 1047558
  %v167 = vsel %vm166, %v165, %v162
  %168 = vrot.lane.b32.xlu0 %v167, 72
  %v169 = vpop.permute.xlu0 %168
  %vm170 = vcmask 654912
  %171 = vst.msk [vmem:[%s1] sm:$0xff] %vm170, %v169
  %s172 = scalar_lea.vmem %s0, 8
  %s173 = smov 3
  %v174 = vld [vmem:[%s172] ss:$16 sm:%s173]
  %s175 = scalar_lea.vmem %s0, 8
  %s176 = smov 12
  %v177 = vld [vmem:[%s175] ss:$16 sm:%s176]
  %vm178 = vcmask 1043458
  %v179 = vsel %vm178, %v177, %v174
  %s180 = scalar_lea.vmem %s0, 8
  %s181 = smov 48
  %v182 = vld [vmem:[%s180] ss:$16 sm:%s181]
  %vm183 = vcmask 1045508
  %v184 = vsel %vm183, %v182, %v179
  %s185 = scalar_lea.vmem %s0, 8
  %s186 = smov 192
  %v187 = vld [vmem:[%s185] ss:$16 sm:%s186]
  %vm188 = vcmask 1047558
  %v189 = vsel %vm188, %v187, %v184
  %190 = vrot.lane.b32.xlu0 %v189, 64
  %v191 = vpop.permute.xlu0 %190
  %vm192 = vcmask 589312
  %193 = vst.msk [vmem:[%s1] sm:$0xff] %vm192, %v191
  %s194 = scalar_lea.vmem %s0, 7
  %s195 = smov 3
  %v196 = vld [vmem:[%s194] ss:$16 sm:%s195]
  %s197 = scalar_lea.vmem %s0, 7
  %s198 = smov 12
  %v199 = vld [vmem:[%s197] ss:$16 sm:%s198]
  %vm200 = vcmask 1043458
  %v201 = vsel %vm200, %v199, %v196
  %s202 = scalar_lea.vmem %s0, 7
  %s203 = smov 48
  %v204 = vld [vmem:[%s202] ss:$16 sm:%s203]
  %vm205 = vcmask 1045508
  %v206 = vsel %vm205, %v204, %v201
  %s207 = scalar_lea.vmem %s0, 7
  %s208 = smov 192
  %v209 = vld [vmem:[%s207] ss:$16 sm:%s208]
  %vm210 = vcmask 1047558
  %v211 = vsel %vm210, %v209, %v206
  %212 = vrot.lane.b32.xlu0 %v211, 56
  %v213 = vpop.permute.xlu0 %212
  %vm214 = vcmask 523712
  %215 = vst.msk [vmem:[%s1] sm:$0xff] %vm214, %v213
  %s216 = scalar_lea.vmem %s0, 6
  %s217 = smov 3
  %v218 = vld [vmem:[%s216] ss:$16 sm:%s217]
  %s219 = scalar_lea.vmem %s0, 6
  %s220 = smov 12
  %v221 = vld [vmem:[%s219] ss:$16 sm:%s220]
  %vm222 = vcmask 1043458
  %v223 = vsel %vm222, %v221, %v218
  %s224 = scalar_lea.vmem %s0, 6
  %s225 = smov 48
  %v226 = vld [vmem:[%s224] ss:$16 sm:%s225]
  %vm227 = vcmask 1045508
  %v228 = vsel %vm227, %v226, %v223
  %s229 = scalar_lea.vmem %s0, 6
  %s230 = smov 192
  %v231 = vld [vmem:[%s229] ss:$16 sm:%s230]
  %vm232 = vcmask 1047558
  %v233 = vsel %vm232, %v231, %v228
  %234 = vrot.lane.b32.xlu0 %v233, 48
  %v235 = vpop.permute.xlu0 %234
  %vm236 = vcmask 458112
  %237 = vst.msk [vmem:[%s1] sm:$0xff] %vm236, %v235
  %s238 = scalar_lea.vmem %s0, 5
  %s239 = smov 3
  %v240 = vld [vmem:[%s238] ss:$16 sm:%s239]
  %s241 = scalar_lea.vmem %s0, 5
  %s242 = smov 12
  %v243 = vld [vmem:[%s241] ss:$16 sm:%s242]
  %vm244 = vcmask 1043458
  %v245 = vsel %vm244, %v243, %v240
  %s246 = scalar_lea.vmem %s0, 5
  %s247 = smov 48
  %v248 = vld [vmem:[%s246] ss:$16 sm:%s247]
  %vm249 = vcmask 1045508
  %v250 = vsel %vm249, %v248, %v245
  %s251 = scalar_lea.vmem %s0, 5
  %s252 = smov 192
  %v253 = vld [vmem:[%s251] ss:$16 sm:%s252]
  %vm254 = vcmask 1047558
  %v255 = vsel %vm254, %v253, %v250
  %256 = vrot.lane.b32.xlu0 %v255, 40
  %v257 = vpop.permute.xlu0 %256
  %vm258 = vcmask 392512
  %259 = vst.msk [vmem:[%s1] sm:$0xff] %vm258, %v257
  %s260 = scalar_lea.vmem %s0, 4
  %s261 = smov 3
  %v262 = vld [vmem:[%s260] ss:$16 sm:%s261]
  %s263 = scalar_lea.vmem %s0, 4
  %s264 = smov 12
  %v265 = vld [vmem:[%s263] ss:$16 sm:%s264]
  %vm266 = vcmask 1043458
  %v267 = vsel %vm266, %v265, %v262
  %s268 = scalar_lea.vmem %s0, 4
  %s269 = smov 48
  %v270 = vld [vmem:[%s268] ss:$16 sm:%s269]
  %vm271 = vcmask 1045508
  %v272 = vsel %vm271, %v270, %v267
  %s273 = scalar_lea.vmem %s0, 4
  %s274 = smov 192
  %v275 = vld [vmem:[%s273] ss:$16 sm:%s274]
  %vm276 = vcmask 1047558
  %v277 = vsel %vm276, %v275, %v272
  %278 = vrot.lane.b32.xlu0 %v277, 32
  %v279 = vpop.permute.xlu0 %278
  %vm280 = vcmask 326912
  %281 = vst.msk [vmem:[%s1] sm:$0xff] %vm280, %v279
  %s282 = scalar_lea.vmem %s0, 3
  %s283 = smov 3
  %v284 = vld [vmem:[%s282] ss:$16 sm:%s283]
  %s285 = scalar_lea.vmem %s0, 3
  %s286 = smov 12
  %v287 = vld [vmem:[%s285] ss:$16 sm:%s286]
  %vm288 = vcmask 1043458
  %v289 = vsel %vm288, %v287, %v284
  %s290 = scalar_lea.vmem %s0, 3
  %s291 = smov 48
  %v292 = vld [vmem:[%s290] ss:$16 sm:%s291]
  %vm293 = vcmask 1045508
  %v294 = vsel %vm293, %v292, %v289
  %s295 = scalar_lea.vmem %s0, 3
  %s296 = smov 192
  %v297 = vld [vmem:[%s295] ss:$16 sm:%s296]
  %vm298 = vcmask 1047558
  %v299 = vsel %vm298, %v297, %v294
  %300 = vrot.lane.b32.xlu0 %v299, 24
  %v301 = vpop.permute.xlu0 %300
  %vm302 = vcmask 261312
  %303 = vst.msk [vmem:[%s1] sm:$0xff] %vm302, %v301
  %s304 = scalar_lea.vmem %s0, 2
  %s305 = smov 3
  %v306 = vld [vmem:[%s304] ss:$16 sm:%s305]
  %s307 = scalar_lea.vmem %s0, 2
  %s308 = smov 12
  %v309 = vld [vmem:[%s307] ss:$16 sm:%s308]
  %vm310 = vcmask 1043458
  %v311 = vsel %vm310, %v309, %v306
  %s312 = scalar_lea.vmem %s0, 2
  %s313 = smov 48
  %v314 = vld [vmem:[%s312] ss:$16 sm:%s313]
  %vm315 = vcmask 1045508
  %v316 = vsel %vm315, %v314, %v311
  %s317 = scalar_lea.vmem %s0, 2
  %s318 = smov 192
  %v319 = vld [vmem:[%s317] ss:$16 sm:%s318]
  %vm320 = vcmask 1047558
  %v321 = vsel %vm320, %v319, %v316
  %322 = vrot.lane.b32.xlu0 %v321, 16
  %v323 = vpop.permute.xlu0 %322
  %vm324 = vcmask 195712
  %325 = vst.msk [vmem:[%s1] sm:$0xff] %vm324, %v323
  %s326 = scalar_lea.vmem %s0, 1
  %s327 = smov 3
  %v328 = vld [vmem:[%s326] ss:$16 sm:%s327]
  %s329 = scalar_lea.vmem %s0, 1
  %s330 = smov 12
  %v331 = vld [vmem:[%s329] ss:$16 sm:%s330]
  %vm332 = vcmask 1043458
  %v333 = vsel %vm332, %v331, %v328
  %s334 = scalar_lea.vmem %s0, 1
  %s335 = smov 48
  %v336 = vld [vmem:[%s334] ss:$16 sm:%s335]
  %vm337 = vcmask 1045508
  %v338 = vsel %vm337, %v336, %v333
  %s339 = scalar_lea.vmem %s0, 1
  %s340 = smov 192
  %v341 = vld [vmem:[%s339] ss:$16 sm:%s340]
  %vm342 = vcmask 1047558
  %v343 = vsel %vm342, %v341, %v338
  %344 = vrot.lane.b32.xlu0 %v343, 8
  %v345 = vpop.permute.xlu0 %344
  %vm346 = vcmask 130112
  %347 = vst.msk [vmem:[%s1] sm:$0xff] %vm346, %v345

// kernel: tile.23
$region0: #{tile.23}
  #allocation0 [shape = 's32[1]{0}', space=sflag, size = 0x4, scoped, tag = 'scoped memory for tile.23']
  %s0 = inlined_call_operand.vmem [shape: f32[8], index: 0, kind: input, shape index: {}]
  %s1 = inlined_call_operand.vmem [shape: f32[16,8], index: 1, kind: output, shape index: {}]
  // Predicated region
  $region2: #{tile.23} parent=0 // pred_check
    _
  $region3: #{tile.23} parent=0 // pred_check_branch
    %3 = sbr.rel (0) target = $region5
  $region4: #{tile.23} parent=0 // pred_region
    _
  $region5: #{tile.23} parent=0 // pred_fallthru
    _
  %v4 = vld [vmem:[%s0] ss:$0 sm:$0xff]
  %5 = vst [vmem:[%s1] sm:$0xff] %v4
  %s6 = scalar_lea.vmem %s1, 8
  %7 = vst [vmem:[%s6] sm:$0xff] %v4

// kernel: tile.24
$region0: #{tile.24}
  %s0 = inlined_call_operand.vmem [shape: f32[16,8], index: 0, kind: input, shape index: {}]
  %s1 = inlined_call_operand.vmem [shape: f32[1,128], index: 1, kind: output, shape index: {}]
  $region1: #{tile.24} parent=0
    #allocation0 [shape = 'u8[4096]{0}', space=vmem, size = 0x1000, scoped, tag = 'scoped mem for output reshape']
    %v2 = vld [vmem:[%s0] sm:$0x1]
    %vm3 = vcmask 64512
    %4 = vst.msk [vmem:[#allocation0] sm:$0x1] %vm3, %v2
    %s5 = scalar_lea.vmem %s0, 15
    %v6 = vld [vmem:[%s5] sm:$0x1]
    %7 = vrot.lane.b32.xlu0 %v6, 120
    %v8 = vpop.permute.xlu0 %7
    %vm9 = vcmask 1048512
    %10 = vst.msk [vmem:[#allocation0] sm:$0x1] %vm9, %v8
    %s11 = scalar_lea.vmem %s0, 14
    %v12 = vld [vmem:[%s11] sm:$0x1]
    %13 = vrot.lane.b32.xlu0 %v12, 112
    %v14 = vpop.permute.xlu0 %13
    %vm15 = vcmask 982912
    %16 = vst.msk [vmem:[#allocation0] sm:$0x1] %vm15, %v14
    %s17 = scalar_lea.vmem %s0, 13
    %v18 = vld [vmem:[%s17] sm:$0x1]
    %19 = vrot.lane.b32.xlu0 %v18, 104
    %v20 = vpop.permute.xlu0 %19
    %vm21 = vcmask 917312
    %22 = vst.msk [vmem:[#allocation0] sm:$0x1] %vm21, %v20
    %s23 = scalar_lea.vmem %s0, 12
    %v24 = vld [vmem:[%s23] sm:$0x1]
    %25 = vrot.lane.b32.xlu0 %v24, 96
    %v26 = vpop.permute.xlu0 %25
    %vm27 = vcmask 851712
    %28 = vst.msk [vmem:[#allocation0] sm:$0x1] %vm27, %v26
    %s29 = scalar_lea.vmem %s0, 11
    %v30 = vld [vmem:[%s29] sm:$0x1]
    %31 = vrot.lane.b32.xlu0 %v30, 88
    %v32 = vpop.permute.xlu0 %31
    %vm33 = vcmask 786112
    %34 = vst.msk [vmem:[#allocation0] sm:$0x1] %vm33, %v32
    %s35 = scalar_lea.vmem %s0, 10
    %v36 = vld [vmem:[%s35] sm:$0x1]
    %37 = vrot.lane.b32.xlu0 %v36, 80
    %v38 = vpop.permute.xlu0 %37
    %vm39 = vcmask 720512
    %40 = vst.msk [vmem:[#allocation0] sm:$0x1] %vm39, %v38
    %s41 = scalar_lea.vmem %s0, 9
    %v42 = vld [vmem:[%s41] sm:$0x1]
    %43 = vrot.lane.b32.xlu0 %v42, 72
    %v44 = vpop.permute.xlu0 %43
    %vm45 = vcmask 654912
    %46 = vst.msk [vmem:[#allocation0] sm:$0x1] %vm45, %v44
    %s47 = scalar_lea.vmem %s0, 8
    %v48 = vld [vmem:[%s47] sm:$0x1]
    %49 = vrot.lane.b32.xlu0 %v48, 64
    %v50 = vpop.permute.xlu0 %49
    %vm51 = vcmask 589312
    %52 = vst.msk [vmem:[#allocation0] sm:$0x1] %vm51, %v50
    %s53 = scalar_lea.vmem %s0, 7
    %v54 = vld [vmem:[%s53] sm:$0x1]
    %55 = vrot.lane.b32.xlu0 %v54, 56
    %v56 = vpop.permute.xlu0 %55
    %vm57 = vcmask 523712
    %58 = vst.msk [vmem:[#allocation0] sm:$0x1] %vm57, %v56
    %s59 = scalar_lea.vmem %s0, 6
    %v60 = vld [vmem:[%s59] sm:$0x1]
    %61 = vrot.lane.b32.xlu0 %v60, 48
    %v62 = vpop.permute.xlu0 %61
    %vm63 = vcmask 458112
    %64 = vst.msk [vmem:[#allocation0] sm:$0x1] %vm63, %v62
    %s65 = scalar_lea.vmem %s0, 5
    %v66 = vld [vmem:[%s65] sm:$0x1]
    %67 = vrot.lane.b32.xlu0 %v66, 40
    %v68 = vpop.permute.xlu0 %67
    %vm69 = vcmask 392512
    %70 = vst.msk [vmem:[#allocation0] sm:$0x1] %vm69, %v68
    %s71 = scalar_lea.vmem %s0, 4
    %v72 = vld [vmem:[%s71] sm:$0x1]
    %73 = vrot.lane.b32.xlu0 %v72, 32
    %v74 = vpop.permute.xlu0 %73
    %vm75 = vcmask 326912
    %76 = vst.msk [vmem:[#allocation0] sm:$0x1] %vm75, %v74
    %s77 = scalar_lea.vmem %s0, 3
    %v78 = vld [vmem:[%s77] sm:$0x1]
    %79 = vrot.lane.b32.xlu0 %v78, 24
    %v80 = vpop.permute.xlu0 %79
    %vm81 = vcmask 261312
    %82 = vst.msk [vmem:[#allocation0] sm:$0x1] %vm81, %v80
    %s83 = scalar_lea.vmem %s0, 2
    %v84 = vld [vmem:[%s83] sm:$0x1]
    %85 = vrot.lane.b32.xlu0 %v84, 16
    %v86 = vpop.permute.xlu0 %85
    %vm87 = vcmask 195712
    %88 = vst.msk [vmem:[#allocation0] sm:$0x1] %vm87, %v86
    %s89 = scalar_lea.vmem %s0, 1
    %v90 = vld [vmem:[%s89] sm:$0x1]
    %91 = vrot.lane.b32.xlu0 %v90, 8
    %v92 = vpop.permute.xlu0 %91
    %vm93 = vcmask 130112
    %94 = vst.msk [vmem:[#allocation0] sm:$0x1] %vm93, %v92
    %s96 = sshll.u32 1, 1
    %s97 = ssub.s32 %s96, 1
    %v99 = vld [vmem:[#allocation0] sm:%s97]
    %s100 = sshll.u32 1, 1
    %s101 = ssub.s32 %s100, 1
    %102 = vst [vmem:[%s1] sm:%s101] %v99

// kernel: unit_forward.1
$region0: #{unit_forward.1}
  #allocation0 [shape = 'u32[]', space=smem, size = 0x4, offset = 0x4, fixed_abs, tag = 'smem constant byte address 0x4 - core index']
  #allocation1 [shape = 'u32[144,128]{1,0:T(1,128)}', space=vmem, size = 0x12000, scoped, tag = 'internal scratch']
  %s0 = inlined_call_operand.vmem [shape: f32[2,18,128], index: 0, kind: input, shape index: {}]
  %s1 = inlined_call_operand.vmem [shape: f32[384,128], index: 1, kind: input, shape index: {}]
  %s2 = inlined_call_operand.vmem [shape: f32[128,8], index: 2, kind: input, shape index: {}]
  %s3 = inlined_call_operand.vmem [shape: f32[8,128], index: 3, kind: input, shape index: {}]
  %s4 = inlined_call_operand.vmem [shape: f32[1,128], index: 4, kind: input, shape index: {}]
  %s5 = inlined_call_operand.vmem [shape: f32[1,128], index: 5, kind: input, shape index: {}]
  %s6 = inlined_call_operand.vmem [shape: f32[32,128], index: 6, kind: output, shape index: {}]
  %s7 = sld [smem:[#allocation0]]
  $region34: #{unit_forward.1} parent=0
    _
  %s9 = ssub.s32 1, %s7
  %s10 = scalar_select 0, %s9, %s7
  // Predicated region
  $region2: #{unit_forward.1} parent=0 // pred_check
    _
  $region3: #{unit_forward.1} parent=0 // pred_check_branch
    %12 = sbr.rel (0) target = $region5
  $region4: #{unit_forward.1} parent=0 // pred_region
    _
  $region5: #{unit_forward.1} parent=0 // pred_fallthru
    _
  // Predicated region
  $region6: #{unit_forward.1} parent=0 // pred_check
    _
  $region7: #{unit_forward.1} parent=0 // pred_check_branch
    %14 = sbr.rel (0) target = $region9
  $region8: #{unit_forward.1} parent=0 // pred_region
    _
  $region9: #{unit_forward.1} parent=0 // pred_fallthru
    _
  // Predicated region
  $region10: #{unit_forward.1} parent=0 // pred_check
    _
  $region11: #{unit_forward.1} parent=0 // pred_check_branch
    %16 = sbr.rel (0) target = $region13
  $region12: #{unit_forward.1} parent=0 // pred_region
    _
  $region13: #{unit_forward.1} parent=0 // pred_fallthru
    _
  // Predicated region
  $region14: #{unit_forward.1} parent=0 // pred_check
    _
  $region15: #{unit_forward.1} parent=0 // pred_check_branch
    %18 = sbr.rel (0) target = $region17
  $region16: #{unit_forward.1} parent=0 // pred_region
    _
  $region17: #{unit_forward.1} parent=0 // pred_fallthru
    _
  // Predicated region
  $region18: #{unit_forward.1} parent=0 // pred_check
    _
  $region19: #{unit_forward.1} parent=0 // pred_check_branch
    %20 = sbr.rel (0) target = $region21
  $region20: #{unit_forward.1} parent=0 // pred_region
    _
  $region21: #{unit_forward.1} parent=0 // pred_fallthru
    _
  // Predicated region
  $region22: #{unit_forward.1} parent=0 // pred_check
    _
  $region23: #{unit_forward.1} parent=0 // pred_check_branch
    %22 = sbr.rel (0) target = $region25
  $region24: #{unit_forward.1} parent=0 // pred_region
    _
  $region25: #{unit_forward.1} parent=0 // pred_fallthru
    _
  %v23 = vld [vmem:[%s0] sm:$0xff]
  %v24 = vld [vmem:[%s0 + $0x8] sm:$0xff]
  %v25 = vld [vmem:[%s0 + $0x10] sm:$0x3]
  %v26 = vld [vmem:[%s0 + $0x18] sm:$0xff]
  %v27 = vld [vmem:[%s0 + $0x20] sm:$0xff]
  %v28 = vld [vmem:[%s0 + $0x28] sm:$0x3]
  %vm32 = vcmask 1046528
  %v33 = vrot.slane %v23, 1
  %v34 = vrot.slane %v24, 1
  %v35 = vsel %vm32, %v33, %v34
  %v36 = vrot.slane %v25, 1
  %v37 = vsel %vm32, %v34, %v36
  %vm40 = vcmask 1045504
  %v41 = vrot.slane %v23, 2
  %v42 = vrot.slane %v24, 2
  %v43 = vsel %vm40, %v41, %v42
  %v44 = vrot.slane %v25, 2
  %v45 = vsel %vm40, %v42, %v44
  %v51 = vrot.slane %v26, 1
  %v52 = vrot.slane %v27, 1
  %v53 = vsel %vm32, %v51, %v52
  %v54 = vrot.slane %v28, 1
  %v55 = vsel %vm32, %v52, %v54
  %v58 = vrot.slane %v26, 2
  %v59 = vrot.slane %v27, 2
  %v60 = vsel %vm40, %v58, %v59
  %v61 = vrot.slane %v28, 2
  %v62 = vsel %vm40, %v59, %v61
  %v65 = vld [vmem:[%s1] sm:$0xff]
  %v66 = vld [vmem:[%s1 + $0x8] sm:$0xff]
  %v67 = vld [vmem:[%s1 + $0x10] sm:$0xff]
  %v68 = vld [vmem:[%s1 + $0x18] sm:$0xff]
  %v69 = vld [vmem:[%s1 + $0x20] sm:$0xff]
  %v70 = vld [vmem:[%s1 + $0x28] sm:$0xff]
  %v71 = vld [vmem:[%s1 + $0x30] sm:$0xff]
  %v72 = vld [vmem:[%s1 + $0x38] sm:$0xff]
  %v73 = vld [vmem:[%s1 + $0x40] sm:$0xff]
  %v74 = vld [vmem:[%s1 + $0x48] sm:$0xff]
  %v75 = vld [vmem:[%s1 + $0x50] sm:$0xff]
  %v76 = vld [vmem:[%s1 + $0x58] sm:$0xff]
  %v77 = vld [vmem:[%s1 + $0x60] sm:$0xff]
  %v78 = vld [vmem:[%s1 + $0x68] sm:$0xff]
  %v79 = vld [vmem:[%s1 + $0x70] sm:$0xff]
  %v80 = vld [vmem:[%s1 + $0x78] sm:$0xff]
  %v81 = vld [vmem:[%s1 + $0x80] sm:$0xff]
  %v82 = vld [vmem:[%s1 + $0x88] sm:$0xff]
  %v83 = vld [vmem:[%s1 + $0x90] sm:$0xff]
  %v84 = vld [vmem:[%s1 + $0x98] sm:$0xff]
  %v85 = vld [vmem:[%s1 + $0xa0] sm:$0xff]
  %v86 = vld [vmem:[%s1 + $0xa8] sm:$0xff]
  %v87 = vld [vmem:[%s1 + $0xb0] sm:$0xff]
  %v88 = vld [vmem:[%s1 + $0xb8] sm:$0xff]
  %v89 = vld [vmem:[%s1 + $0xc0] sm:$0xff]
  %v90 = vld [vmem:[%s1 + $0xc8] sm:$0xff]
  %v91 = vld [vmem:[%s1 + $0xd0] sm:$0xff]
  %v92 = vld [vmem:[%s1 + $0xd8] sm:$0xff]
  %v93 = vld [vmem:[%s1 + $0xe0] sm:$0xff]
  %v94 = vld [vmem:[%s1 + $0xe8] sm:$0xff]
  %v95 = vld [vmem:[%s1 + $0xf0] sm:$0xff]
  %v96 = vld [vmem:[%s1 + $0xf8] sm:$0xff]
  %v97 = vld [vmem:[%s1 + $0x100] sm:$0xff]
  %v98 = vld [vmem:[%s1 + $0x108] sm:$0xff]
  %v99 = vld [vmem:[%s1 + $0x110] sm:$0xff]
  %v100 = vld [vmem:[%s1 + $0x118] sm:$0xff]
  %v101 = vld [vmem:[%s1 + $0x120] sm:$0xff]
  %v102 = vld [vmem:[%s1 + $0x128] sm:$0xff]
  %v103 = vld [vmem:[%s1 + $0x130] sm:$0xff]
  %v104 = vld [vmem:[%s1 + $0x138] sm:$0xff]
  %v105 = vld [vmem:[%s1 + $0x140] sm:$0xff]
  %v106 = vld [vmem:[%s1 + $0x148] sm:$0xff]
  %v107 = vld [vmem:[%s1 + $0x150] sm:$0xff]
  %v108 = vld [vmem:[%s1 + $0x158] sm:$0xff]
  %v109 = vld [vmem:[%s1 + $0x160] sm:$0xff]
  %v110 = vld [vmem:[%s1 + $0x168] sm:$0xff]
  %v111 = vld [vmem:[%s1 + $0x170] sm:$0xff]
  %v112 = vld [vmem:[%s1 + $0x178] sm:$0xff]
  %113 = vmatprep.subr.mxu0 0.0
  %114 = vmatpush1.msra.mxu0 %v80
  %115 = vmatprep.subr.mxu0 0.0
  %116 = vmatpush1.msra.mxu0 %v79
  %117 = vmatprep.subr.mxu0 0.0
  %118 = vmatpush1.msra.mxu0 %v78
  %119 = vmatprep.subr.mxu0 0.0
  %120 = vmatpush1.msra.mxu0 %v77
  %121 = vmatprep.subr.mxu0 0.0
  %122 = vmatpush1.msra.mxu0 %v76
  %123 = vmatprep.subr.mxu0 0.0
  %124 = vmatpush1.msra.mxu0 %v75
  %125 = vmatprep.subr.mxu0 0.0
  %126 = vmatpush1.msra.mxu0 %v74
  %127 = vmatprep.subr.mxu0 0.0
  %128 = vmatpush1.msra.mxu0 %v73
  %129 = vmatprep.subr.mxu0 0.0
  %130 = vmatpush1.msra.mxu0 %v72
  %131 = vmatprep.subr.mxu0 0.0
  %132 = vmatpush1.msra.mxu0 %v71
  %133 = vmatprep.subr.mxu0 0.0
  %134 = vmatpush1.msra.mxu0 %v70
  %135 = vmatprep.subr.mxu0 0.0
  %136 = vmatpush1.msra.mxu0 %v69
  %137 = vmatprep.subr.mxu0 0.0
  %138 = vmatpush1.msra.mxu0 %v68
  %139 = vmatprep.subr.mxu0 0.0
  %140 = vmatpush1.msra.mxu0 %v67
  %141 = vmatprep.subr.mxu0 0.0
  %142 = vmatpush1.msra.mxu0 %v66
  %143 = vmatprep.subr.mxu0 0.0
  %144 = vmatpush1.msra.mxu0 %v65
  %145 = vmatprep.subr.mxu0 0.0
  %146 = vmatpush2.msra.mxu0 %v96
  %147 = vmatprep.subr.mxu0 0.0
  %148 = vmatpush2.msra.mxu0 %v95
  %149 = vmatprep.subr.mxu0 0.0
  %150 = vmatpush2.msra.mxu0 %v94
  %151 = vmatprep.subr.mxu0 0.0
  %152 = vmatpush2.msra.mxu0 %v93
  %153 = vmatprep.subr.mxu0 0.0
  %154 = vmatpush2.msra.mxu0 %v92
  %155 = vmatprep.subr.mxu0 0.0
  %156 = vmatpush2.msra.mxu0 %v91
  %157 = vmatprep.subr.mxu0 0.0
  %158 = vmatpush2.msra.mxu0 %v90
  %159 = vmatprep.subr.mxu0 0.0
  %160 = vmatpush2.msra.mxu0 %v89
  %161 = vmatprep.subr.mxu0 0.0
  %162 = vmatpush2.msra.mxu0 %v88
  %163 = vmatprep.subr.mxu0 0.0
  %164 = vmatpush2.msra.mxu0 %v87
  %165 = vmatprep.subr.mxu0 0.0
  %166 = vmatpush2.msra.mxu0 %v86
  %167 = vmatprep.subr.mxu0 0.0
  %168 = vmatpush2.msra.mxu0 %v85
  %169 = vmatprep.subr.mxu0 0.0
  %170 = vmatpush2.msra.mxu0 %v84
  %171 = vmatprep.subr.mxu0 0.0
  %172 = vmatpush2.msra.mxu0 %v83
  %173 = vmatprep.subr.mxu0 0.0
  %174 = vmatpush2.msra.mxu0 %v82
  %175 = vmatprep.subr.mxu0 0.0
  %176 = vmatpush2.msra.mxu0 %v81
  %177 = vmatprep.mubr.f32.mxu0 %v35
  %178 = vmatmul.mubr.f32.gmra.mxu0 %v23
  %v179 = vpop.f32.mrf.mxu0
  %v180 = vadd.f32 0.0, %v179
  %v181 = vpop.f32.mrf.mxu0
  %182 = vmatprep.mubr.f32.mxu0 %v37
  %183 = vmatmul.mubr.f32.gmra.mxu0 %v24
  %v184 = vpop.f32.mrf.mxu0
  %v185 = vadd.f32 0.0, %v184
  %v186 = vpop.f32.mrf.mxu0
  %187 = vmatprep.mubr.f32.mxu0 %v53
  %188 = vmatmul.mubr.f32.gmra.mxu0 %v26
  %v189 = vpop.f32.mrf.mxu0
  %v190 = vadd.f32 0.0, %v189
  %v191 = vpop.f32.mrf.mxu0
  %192 = vmatprep.mubr.f32.mxu0 %v55
  %193 = vmatmul.mubr.f32.gmra.mxu0 %v27
  %v194 = vpop.f32.mrf.mxu0
  %v195 = vadd.f32 0.0, %v194
  %v196 = vpop.f32.mrf.mxu0
  %197 = vdwg.mxu0
  %198 = vmatprep.subr.mxu0 0.0
  %199 = vmatpush1.msra.mxu0 %v112
  %200 = vmatprep.subr.mxu0 0.0
  %201 = vmatpush1.msra.mxu0 %v111
  %202 = vmatprep.subr.mxu0 0.0
  %203 = vmatpush1.msra.mxu0 %v110
  %204 = vmatprep.subr.mxu0 0.0
  %205 = vmatpush1.msra.mxu0 %v109
  %206 = vmatprep.subr.mxu0 0.0
  %207 = vmatpush1.msra.mxu0 %v108
  %208 = vmatprep.subr.mxu0 0.0
  %209 = vmatpush1.msra.mxu0 %v107
  %210 = vmatprep.subr.mxu0 0.0
  %211 = vmatpush1.msra.mxu0 %v106
  %212 = vmatprep.subr.mxu0 0.0
  %213 = vmatpush1.msra.mxu0 %v105
  %214 = vmatprep.subr.mxu0 0.0
  %215 = vmatpush1.msra.mxu0 %v104
  %216 = vmatprep.subr.mxu0 0.0
  %217 = vmatpush1.msra.mxu0 %v103
  %218 = vmatprep.subr.mxu0 0.0
  %219 = vmatpush1.msra.mxu0 %v102
  %220 = vmatprep.subr.mxu0 0.0
  %221 = vmatpush1.msra.mxu0 %v101
  %222 = vmatprep.subr.mxu0 0.0
  %223 = vmatpush1.msra.mxu0 %v100
  %224 = vmatprep.subr.mxu0 0.0
  %225 = vmatpush1.msra.mxu0 %v99
  %226 = vmatprep.subr.mxu0 0.0
  %227 = vmatpush1.msra.mxu0 %v98
  %228 = vmatprep.subr.mxu0 0.0
  %229 = vmatpush1.msra.mxu0 %v97
  %230 = vmatprep.subr.mxu0 0.0
  %231 = vmatpush2.msra.mxu0 0.0
  %232 = vmatprep.subr.mxu0 0.0
  %233 = vmatpush2.msra.mxu0 0.0
  %234 = vmatprep.subr.mxu0 0.0
  %235 = vmatpush2.msra.mxu0 0.0
  %236 = vmatprep.subr.mxu0 0.0
  %237 = vmatpush2.msra.mxu0 0.0
  %238 = vmatprep.subr.mxu0 0.0
  %239 = vmatpush2.msra.mxu0 0.0
  %240 = vmatprep.subr.mxu0 0.0
  %241 = vmatpush2.msra.mxu0 0.0
  %242 = vmatprep.subr.mxu0 0.0
  %243 = vmatpush2.msra.mxu0 0.0
  %244 = vmatprep.subr.mxu0 0.0
  %245 = vmatpush2.msra.mxu0 0.0
  %246 = vmatprep.subr.mxu0 0.0
  %247 = vmatpush2.msra.mxu0 0.0
  %248 = vmatprep.subr.mxu0 0.0
  %249 = vmatpush2.msra.mxu0 0.0
  %250 = vmatprep.subr.mxu0 0.0
  %251 = vmatpush2.msra.mxu0 0.0
  %252 = vmatprep.subr.mxu0 0.0
  %253 = vmatpush2.msra.mxu0 0.0
  %254 = vmatprep.subr.mxu0 0.0
  %255 = vmatpush2.msra.mxu0 0.0
  %256 = vmatprep.subr.mxu0 0.0
  %257 = vmatpush2.msra.mxu0 0.0
  %258 = vmatprep.subr.mxu0 0.0
  %259 = vmatpush2.msra.mxu0 0.0
  %260 = vmatprep.subr.mxu0 0.0
  %261 = vmatpush2.msra.mxu0 0.0
  %262 = vmatprep.mubr.f32.mxu0 0.0
  %263 = vmatmul.mubr.f32.gmra.mxu0 %v43
  %v264 = vpop.f32.mrf.mxu0
  %v265 = vadd.f32 %v180, %v264
  %v266 = vpop.f32.mrf.mxu0
  %267 = vmatprep.mubr.f32.mxu0 0.0
  %268 = vmatmul.mubr.f32.gmra.mxu0 %v45
  %v269 = vpop.f32.mrf.mxu0
  %v270 = vadd.f32 %v185, %v269
  %v271 = vpop.f32.mrf.mxu0
  %272 = vmatprep.mubr.f32.mxu0 0.0
  %273 = vmatmul.mubr.f32.gmra.mxu0 %v60
  %v274 = vpop.f32.mrf.mxu0
  %v275 = vadd.f32 %v190, %v274
  %v276 = vpop.f32.mrf.mxu0
  %277 = vmatprep.mubr.f32.mxu0 0.0
  %278 = vmatmul.mubr.f32.gmra.mxu0 %v62
  %v279 = vpop.f32.mrf.mxu0
  %v280 = vadd.f32 %v195, %v279
  %v281 = vpop.f32.mrf.mxu0
  %282 = vdwg.mxu0
  %v283 = vadd.f32 %v265, %v270
  %v284 = vadd.f32 %v283, %v275
  %v285 = vadd.f32 %v284, %v280
  %v286 = vrot.slane %v285, 4
  %v287 = vadd.f32 %v285, %v286
  %v288 = vrot.slane %v287, 2
  %v289 = vadd.f32 %v287, %v288
  %v290 = vrot.slane %v289, 1
  %v291 = vadd.f32 %v289, %v290
  %v292 = vld [vmem:[%s2] sm:$0xff]
  %v293 = vld [vmem:[%s2 + $0x8] sm:$0xff]
  %v294 = vld [vmem:[%s2 + $0x10] sm:$0xff]
  %v295 = vld [vmem:[%s2 + $0x18] sm:$0xff]
  %v296 = vld [vmem:[%s2 + $0x20] sm:$0xff]
  %v297 = vld [vmem:[%s2 + $0x28] sm:$0xff]
  %v298 = vld [vmem:[%s2 + $0x30] sm:$0xff]
  %v299 = vld [vmem:[%s2 + $0x38] sm:$0xff]
  %v300 = vld [vmem:[%s2 + $0x40] sm:$0xff]
  %v301 = vld [vmem:[%s2 + $0x48] sm:$0xff]
  %v302 = vld [vmem:[%s2 + $0x50] sm:$0xff]
  %v303 = vld [vmem:[%s2 + $0x58] sm:$0xff]
  %v304 = vld [vmem:[%s2 + $0x60] sm:$0xff]
  %v305 = vld [vmem:[%s2 + $0x68] sm:$0xff]
  %v306 = vld [vmem:[%s2 + $0x70] sm:$0xff]
  %v307 = vld [vmem:[%s2 + $0x78] sm:$0xff]
  %308 = vmatprep.subr.mxu0 0.0
  %309 = vmatpush1.msra.mxu0 %v307
  %310 = vmatprep.subr.mxu0 0.0
  %311 = vmatpush1.msra.mxu0 %v306
  %312 = vmatprep.subr.mxu0 0.0
  %313 = vmatpush1.msra.mxu0 %v305
  %314 = vmatprep.subr.mxu0 0.0
  %315 = vmatpush1.msra.mxu0 %v304
  %316 = vmatprep.subr.mxu0 0.0
  %317 = vmatpush1.msra.mxu0 %v303
  %318 = vmatprep.subr.mxu0 0.0
  %319 = vmatpush1.msra.mxu0 %v302
  %320 = vmatprep.subr.mxu0 0.0
  %321 = vmatpush1.msra.mxu0 %v301
  %322 = vmatprep.subr.mxu0 0.0
  %323 = vmatpush1.msra.mxu0 %v300
  %324 = vmatprep.subr.mxu0 0.0
  %325 = vmatpush1.msra.mxu0 %v299
  %326 = vmatprep.subr.mxu0 0.0
  %327 = vmatpush1.msra.mxu0 %v298
  %328 = vmatprep.subr.mxu0 0.0
  %329 = vmatpush1.msra.mxu0 %v297
  %330 = vmatprep.subr.mxu0 0.0
  %331 = vmatpush1.msra.mxu0 %v296
  %332 = vmatprep.subr.mxu0 0.0
  %333 = vmatpush1.msra.mxu0 %v295
  %334 = vmatprep.subr.mxu0 0.0
  %335 = vmatpush1.msra.mxu0 %v294
  %336 = vmatprep.subr.mxu0 0.0
  %337 = vmatpush1.msra.mxu0 %v293
  %338 = vmatprep.subr.mxu0 0.0
  %339 = vmatpush1.msra.mxu0 %v292
  %340 = vmatprep.subr.mxu0 0.0
  %341 = vmatpush2.msra.mxu0 0.0
  %342 = vmatprep.subr.mxu0 0.0
  %343 = vmatpush2.msra.mxu0 0.0
  %344 = vmatprep.subr.mxu0 0.0
  %345 = vmatpush2.msra.mxu0 0.0
  %346 = vmatprep.subr.mxu0 0.0
  %347 = vmatpush2.msra.mxu0 0.0
  %348 = vmatprep.subr.mxu0 0.0
  %349 = vmatpush2.msra.mxu0 0.0
  %350 = vmatprep.subr.mxu0 0.0
  %351 = vmatpush2.msra.mxu0 0.0
  %352 = vmatprep.subr.mxu0 0.0
  %353 = vmatpush2.msra.mxu0 0.0
  %354 = vmatprep.subr.mxu0 0.0
  %355 = vmatpush2.msra.mxu0 0.0
  %356 = vmatprep.subr.mxu0 0.0
  %357 = vmatpush2.msra.mxu0 0.0
  %358 = vmatprep.subr.mxu0 0.0
  %359 = vmatpush2.msra.mxu0 0.0
  %360 = vmatprep.subr.mxu0 0.0
  %361 = vmatpush2.msra.mxu0 0.0
  %362 = vmatprep.subr.mxu0 0.0
  %363 = vmatpush2.msra.mxu0 0.0
  %364 = vmatprep.subr.mxu0 0.0
  %365 = vmatpush2.msra.mxu0 0.0
  %366 = vmatprep.subr.mxu0 0.0
  %367 = vmatpush2.msra.mxu0 0.0
  %368 = vmatprep.subr.mxu0 0.0
  %369 = vmatpush2.msra.mxu0 0.0
  %370 = vmatprep.subr.mxu0 0.0
  %371 = vmatpush2.msra.mxu0 0.0
  %372 = vmatprep.mubr.f32.mxu0 0.0
  %373 = vmatmul.mubr.f32.gmra.mxu0 %v291
  %v374 = vpop.f32.mrf.mxu0
  %v375 = vadd.f32 0.0, %v374
  %v376 = vpop.f32.mrf.mxu0
  %377 = vdwg.mxu0
  %v378 = vmul.f32 %v375, 0.001953125
  %v379 = vld [vmem:[%s3] sm:$0xff]
  %vm380 = vcmask 64512
  %v382 = vsel %vm380, %v378, 0
  %384 = vmatprep.subr.mxu0 0.0
  %385 = vmatpush1.msra.mxu0 0.0
  %386 = vmatprep.subr.mxu0 0.0
  %387 = vmatpush1.msra.mxu0 0.0
  %388 = vmatprep.subr.mxu0 0.0
  %389 = vmatpush1.msra.mxu0 0.0
  %390 = vmatprep.subr.mxu0 0.0
  %391 = vmatpush1.msra.mxu0 0.0
  %392 = vmatprep.subr.mxu0 0.0
  %393 = vmatpush1.msra.mxu0 0.0
  %394 = vmatprep.subr.mxu0 0.0
  %395 = vmatpush1.msra.mxu0 0.0
  %396 = vmatprep.subr.mxu0 0.0
  %397 = vmatpush1.msra.mxu0 0.0
  %398 = vmatprep.subr.mxu0 0.0
  %399 = vmatpush1.msra.mxu0 0.0
  %400 = vmatprep.subr.mxu0 0.0
  %401 = vmatpush1.msra.mxu0 0.0
  %402 = vmatprep.subr.mxu0 0.0
  %403 = vmatpush1.msra.mxu0 0.0
  %404 = vmatprep.subr.mxu0 0.0
  %405 = vmatpush1.msra.mxu0 0.0
  %406 = vmatprep.subr.mxu0 0.0
  %407 = vmatpush1.msra.mxu0 0.0
  %408 = vmatprep.subr.mxu0 0.0
  %409 = vmatpush1.msra.mxu0 0.0
  %410 = vmatprep.subr.mxu0 0.0
  %411 = vmatpush1.msra.mxu0 0.0
  %412 = vmatprep.subr.mxu0 0.0
  %413 = vmatpush1.msra.mxu0 0.0
  %414 = vmatprep.subr.mxu0 0.0
  %415 = vmatpush1.msra.mxu0 %v379
  %416 = vmatprep.subr.mxu0 0.0
  %417 = vmatpush2.msra.mxu0 0.0
  %418 = vmatprep.subr.mxu0 0.0
  %419 = vmatpush2.msra.mxu0 0.0
  %420 = vmatprep.subr.mxu0 0.0
  %421 = vmatpush2.msra.mxu0 0.0
  %422 = vmatprep.subr.mxu0 0.0
  %423 = vmatpush2.msra.mxu0 0.0
  %424 = vmatprep.subr.mxu0 0.0
  %425 = vmatpush2.msra.mxu0 0.0
  %426 = vmatprep.subr.mxu0 0.0
  %427 = vmatpush2.msra.mxu0 0.0
  %428 = vmatprep.subr.mxu0 0.0
  %429 = vmatpush2.msra.mxu0 0.0
  %430 = vmatprep.subr.mxu0 0.0
  %431 = vmatpush2.msra.mxu0 0.0
  %432 = vmatprep.subr.mxu0 0.0
  %433 = vmatpush2.msra.mxu0 0.0
  %434 = vmatprep.subr.mxu0 0.0
  %435 = vmatpush2.msra.mxu0 0.0
  %436 = vmatprep.subr.mxu0 0.0
  %437 = vmatpush2.msra.mxu0 0.0
  %438 = vmatprep.subr.mxu0 0.0
  %439 = vmatpush2.msra.mxu0 0.0
  %440 = vmatprep.subr.mxu0 0.0
  %441 = vmatpush2.msra.mxu0 0.0
  %442 = vmatprep.subr.mxu0 0.0
  %443 = vmatpush2.msra.mxu0 0.0
  %444 = vmatprep.subr.mxu0 0.0
  %445 = vmatpush2.msra.mxu0 0.0
  %446 = vmatprep.subr.mxu0 0.0
  %447 = vmatpush2.msra.mxu0 0.0
  %448 = vmatprep.mubr.f32.mxu0 0.0
  %449 = vmatmul.mubr.f32.gmra.mxu0 %v382
  %v450 = vpop.f32.mrf.mxu0
  %v451 = vadd.f32 0.0, %v450
  %v452 = vpop.f32.mrf.mxu0
  %453 = vdwg.mxu0
  %v454 = vlaneseq
  %v455 = vshrl.u32 %v454, 7
  %v456 = vsub.s32 0, %v455
  %v457 = vrot.slane %v451, %v456
  %v458 = vsub.f32 %v265, %v457
  %v459 = vsub.f32 %v270, %v457
  %v460 = vsub.f32 %v275, %v457
  %v461 = vsub.f32 %v280, %v457
  %v462 = vmul.f32 %v458, %v458
  %v463 = vmul.f32 %v459, %v459
  %v464 = vmul.f32 %v460, %v460
  %v465 = vmul.f32 %v461, %v461
  %v466 = vadd.f32 %v462, %v463
  %v467 = vadd.f32 %v466, %v464
  %v468 = vadd.f32 %v467, %v465
  %v469 = vrot.slane %v468, 4
  %v470 = vadd.f32 %v468, %v469
  %v471 = vrot.slane %v470, 2
  %v472 = vadd.f32 %v470, %v471
  %v473 = vrot.slane %v472, 1
  %v474 = vadd.f32 %v472, %v473
  %475 = vmatprep.subr.mxu0 0.0
  %476 = vmatpush1.msra.mxu0 %v307
  %477 = vmatprep.subr.mxu0 0.0
  %478 = vmatpush1.msra.mxu0 %v306
  %479 = vmatprep.subr.mxu0 0.0
  %480 = vmatpush1.msra.mxu0 %v305
  %481 = vmatprep.subr.mxu0 0.0
  %482 = vmatpush1.msra.mxu0 %v304
  %483 = vmatprep.subr.mxu0 0.0
  %484 = vmatpush1.msra.mxu0 %v303
  %485 = vmatprep.subr.mxu0 0.0
  %486 = vmatpush1.msra.mxu0 %v302
  %487 = vmatprep.subr.mxu0 0.0
  %488 = vmatpush1.msra.mxu0 %v301
  %489 = vmatprep.subr.mxu0 0.0
  %490 = vmatpush1.msra.mxu0 %v300
  %491 = vmatprep.subr.mxu0 0.0
  %492 = vmatpush1.msra.mxu0 %v299
  %493 = vmatprep.subr.mxu0 0.0
  %494 = vmatpush1.msra.mxu0 %v298
  %495 = vmatprep.subr.mxu0 0.0
  %496 = vmatpush1.msra.mxu0 %v297
  %497 = vmatprep.subr.mxu0 0.0
  %498 = vmatpush1.msra.mxu0 %v296
  %499 = vmatprep.subr.mxu0 0.0
  %500 = vmatpush1.msra.mxu0 %v295
  %501 = vmatprep.subr.mxu0 0.0
  %502 = vmatpush1.msra.mxu0 %v294
  %503 = vmatprep.subr.mxu0 0.0
  %504 = vmatpush1.msra.mxu0 %v293
  %505 = vmatprep.subr.mxu0 0.0
  %506 = vmatpush1.msra.mxu0 %v292
  %507 = vmatprep.subr.mxu0 0.0
  %508 = vmatpush2.msra.mxu0 0.0
  %509 = vmatprep.subr.mxu0 0.0
  %510 = vmatpush2.msra.mxu0 0.0
  %511 = vmatprep.subr.mxu0 0.0
  %512 = vmatpush2.msra.mxu0 0.0
  %513 = vmatprep.subr.mxu0 0.0
  %514 = vmatpush2.msra.mxu0 0.0
  %515 = vmatprep.subr.mxu0 0.0
  %516 = vmatpush2.msra.mxu0 0.0
  %517 = vmatprep.subr.mxu0 0.0
  %518 = vmatpush2.msra.mxu0 0.0
  %519 = vmatprep.subr.mxu0 0.0
  %520 = vmatpush2.msra.mxu0 0.0
  %521 = vmatprep.subr.mxu0 0.0
  %522 = vmatpush2.msra.mxu0 0.0
  %523 = vmatprep.subr.mxu0 0.0
  %524 = vmatpush2.msra.mxu0 0.0
  %525 = vmatprep.subr.mxu0 0.0
  %526 = vmatpush2.msra.mxu0 0.0
  %527 = vmatprep.subr.mxu0 0.0
  %528 = vmatpush2.msra.mxu0 0.0
  %529 = vmatprep.subr.mxu0 0.0
  %530 = vmatpush2.msra.mxu0 0.0
  %531 = vmatprep.subr.mxu0 0.0
  %532 = vmatpush2.msra.mxu0 0.0
  %533 = vmatprep.subr.mxu0 0.0
  %534 = vmatpush2.msra.mxu0 0.0
  %535 = vmatprep.subr.mxu0 0.0
  %536 = vmatpush2.msra.mxu0 0.0
  %537 = vmatprep.subr.mxu0 0.0
  %538 = vmatpush2.msra.mxu0 0.0
  %539 = vmatprep.mubr.f32.mxu0 0.0
  %540 = vmatmul.mubr.f32.gmra.mxu0 %v474
  %v541 = vpop.f32.mrf.mxu0
  %v542 = vadd.f32 0.0, %v541
  %v543 = vpop.f32.mrf.mxu0
  %544 = vdwg.mxu0
  %v545 = vmul.f32 %v542, 0.001953125
  %v546 = vld [vmem:[%s4] sm:$0x1]
  %v548 = vsel %vm380, %v545, 0
  %550 = vmatprep.subr.mxu0 0.0
  %551 = vmatpush1.msra.mxu0 0.0
  %552 = vmatprep.subr.mxu0 0.0
  %553 = vmatpush1.msra.mxu0 0.0
  %554 = vmatprep.subr.mxu0 0.0
  %555 = vmatpush1.msra.mxu0 0.0
  %556 = vmatprep.subr.mxu0 0.0
  %557 = vmatpush1.msra.mxu0 0.0
  %558 = vmatprep.subr.mxu0 0.0
  %559 = vmatpush1.msra.mxu0 0.0
  %560 = vmatprep.subr.mxu0 0.0
  %561 = vmatpush1.msra.mxu0 0.0
  %562 = vmatprep.subr.mxu0 0.0
  %563 = vmatpush1.msra.mxu0 0.0
  %564 = vmatprep.subr.mxu0 0.0
  %565 = vmatpush1.msra.mxu0 0.0
  %566 = vmatprep.subr.mxu0 0.0
  %567 = vmatpush1.msra.mxu0 0.0
  %568 = vmatprep.subr.mxu0 0.0
  %569 = vmatpush1.msra.mxu0 0.0
  %570 = vmatprep.subr.mxu0 0.0
  %571 = vmatpush1.msra.mxu0 0.0
  %572 = vmatprep.subr.mxu0 0.0
  %573 = vmatpush1.msra.mxu0 0.0
  %574 = vmatprep.subr.mxu0 0.0
  %575 = vmatpush1.msra.mxu0 0.0
  %576 = vmatprep.subr.mxu0 0.0
  %577 = vmatpush1.msra.mxu0 0.0
  %578 = vmatprep.subr.mxu0 0.0
  %579 = vmatpush1.msra.mxu0 0.0
  %580 = vmatprep.subr.mxu0 0.0
  %581 = vmatpush1.msra.mxu0 %v379
  %582 = vmatprep.subr.mxu0 0.0
  %583 = vmatpush2.msra.mxu0 0.0
  %584 = vmatprep.subr.mxu0 0.0
  %585 = vmatpush2.msra.mxu0 0.0
  %586 = vmatprep.subr.mxu0 0.0
  %587 = vmatpush2.msra.mxu0 0.0
  %588 = vmatprep.subr.mxu0 0.0
  %589 = vmatpush2.msra.mxu0 0.0
  %590 = vmatprep.subr.mxu0 0.0
  %591 = vmatpush2.msra.mxu0 0.0
  %592 = vmatprep.subr.mxu0 0.0
  %593 = vmatpush2.msra.mxu0 0.0
  %594 = vmatprep.subr.mxu0 0.0
  %595 = vmatpush2.msra.mxu0 0.0
  %596 = vmatprep.subr.mxu0 0.0
  %597 = vmatpush2.msra.mxu0 0.0
  %598 = vmatprep.subr.mxu0 0.0
  %599 = vmatpush2.msra.mxu0 0.0
  %600 = vmatprep.subr.mxu0 0.0
  %601 = vmatpush2.msra.mxu0 0.0
  %602 = vmatprep.subr.mxu0 0.0
  %603 = vmatpush2.msra.mxu0 0.0
  %604 = vmatprep.subr.mxu0 0.0
  %605 = vmatpush2.msra.mxu0 0.0
  %606 = vmatprep.subr.mxu0 0.0
  %607 = vmatpush2.msra.mxu0 0.0
  %608 = vmatprep.subr.mxu0 0.0
  %609 = vmatpush2.msra.mxu0 0.0
  %610 = vmatprep.subr.mxu0 0.0
  %611 = vmatpush2.msra.mxu0 0.0
  %612 = vmatprep.subr.mxu0 0.0
  %613 = vmatpush2.msra.mxu0 0.0
  %614 = vmatprep.mubr.f32.mxu0 0.0
  %615 = vmatmul.mubr.f32.gmra.mxu0 %v548
  %v616 = vpop.f32.mrf.mxu0
  %v617 = vadd.f32 1e-05, %v616
  %v618 = vpop.f32.mrf.mxu0
  %619 = vdwg.mxu0
  %v620 = vrsqrt.pop %v617
  %v621 = vmul.f32 %v546, %v620
  %v623 = vlaneseq
  %v624 = vshrl.u32 %v623, 7
  %v625 = vsub.s32 0, %v624
  %v626 = vrot.slane %v621, %v625
  %v628 = vmul.f32 %v458, %v626
  %v629 = vmul.f32 %v459, %v626
  %v630 = vmul.f32 %v460, %v626
  %v631 = vmul.f32 %v461, %v626
  %v632 = vld [vmem:[%s5] sm:$0x1]
  %v634 = vlaneseq
  %v635 = vshrl.u32 %v634, 7
  %v636 = vsub.s32 0, %v635
  %v637 = vrot.slane %v632, %v636
  %v639 = vadd.f32 %v628, %v637
  %v640 = vadd.f32 %v629, %v637
  %v641 = vadd.f32 %v630, %v637
  %v642 = vadd.f32 %v631, %v637
  %v643 = vmax.f32 %v639, 0.0
  %v644 = vmax.f32 %v640, 0.0
  %v645 = vmax.f32 %v641, 0.0
  %v646 = vmax.f32 %v642, 0.0
  %647 = vst [vmem:[%s6] sm:$0xff] %v643
  %648 = vst [vmem:[%s6 + $0x8] sm:$0xff] %v644
  %649 = vst [vmem:[%s6 + $0x10] sm:$0xff] %v645
  %650 = vst [vmem:[%s6 + $0x18] sm:$0xff] %v646
  // Predicated region
  $region26: #{unit_forward.1} parent=0 // pred_check
    _
  $region27: #{unit_forward.1} parent=0 // pred_check_branch
    %652 = sbr.rel (0) target = $region29
  $region28: #{unit_forward.1} parent=0 // pred_region
    _
  $region29: #{unit_forward.1} parent=0 // pred_fallthru
    _
  // Predicated region
  $region30: #{unit_forward.1} parent=0 // pred_check
    _
  $region31: #{unit_forward.1} parent=0 // pred_check_branch
    %654 = sbr.rel (0) target = $region33
  $region32: #{unit_forward.1} parent=0 // pred_region
    _
  $region33: #{unit_forward.1} parent=0 // pred_fallthru
    _

</llo_original>
